<compile_context>
chip_gen: v6e
topology: v6e:2x2x1
jax: 0.10.0
libtpu: 0.0.40
codegen_flags: <defaults>
</compile_context>

<pallas_src>
import jax
import jax.numpy as jnp
from jax.experimental import pallas as pl
from jax.experimental.pallas import tpu as pltpu


def _make_kernel(n):
    def kernel(*refs):
        # refs = (comb_ref[SMEM f32[n]], x_0, ..., x_{n-1}, o_ref)
        comb_ref = refs[0]
        x_refs = refs[1:1 + n]
        o_ref = refs[1 + n]
        acc = x_refs[0][...].astype(jnp.float32) * comb_ref[0]
        for i in range(1, n):            # n is a static Python int -> unrolled
            acc = acc + x_refs[i][...].astype(jnp.float32) * comb_ref[i]
        o_ref[...] = acc.astype(o_ref.dtype)
    return kernel


def _pick_lane(total):
    for cand in (2048, 1024, 512, 256, 128):
        if total % cand == 0:
            return cand
    return 128  # ragged tail handled outside the kernel


def _sublane(dtype):
    bits = jnp.dtype(dtype).itemsize * 8
    if bits >= 32:
        return 8
    if bits == 16:
        return 16
    return 32


def _vmem_budgets():
    cap = 64 << 20  # conservative fallback (v7x-sized per-core VMEM)
    try:
        cap = int(pltpu.get_tpu_info().vmem_capacity_bytes)
    except Exception:
        pass
    tile_budget = int(cap * 0.625)   # ~40 MiB on v7x, ~80 MiB on v5e/v6e
    limit_cap = int(cap * 0.85)      # ~56 MiB on v7x, ~108 MiB on v5e/v6e
    return tile_budget, limit_cap


def _pick_tm(M, n, lane, elt_bytes, tm_hint, sublane, tile_budget):
    # Double-buffered (n inputs + 1 output) tiles must fit the tile budget.
    bytes_per_row = 2 * (n + 1) * lane * elt_bytes
    tm_cap = max(sublane, (tile_budget // bytes_per_row) // sublane * sublane)
    tm = min(int(tm_hint), tm_cap, M)
    if M >= 2 * sublane:
        # Guarantee >= 2 grid steps so v7x can shard across its 2 TensorCores.
        half = ((M + 1) // 2 + sublane - 1) // sublane * sublane
        tm = min(tm, half)
    if tm >= M:
        return M                                   # full extent is always legal
    return max(sublane, (tm // sublane) * sublane)  # dtype-native sublane tile


def _jnp_combination(args, comb_f32, dtype):
    out = args[0].astype(jnp.float32) * comb_f32[0]
    for i in range(1, len(args)):
        out = out + args[i].astype(jnp.float32) * comb_f32[i]
    return out.astype(dtype)


def convex_combination(args, comb, *, tm_hint=1024, force_pallas=False):
    """Equivalent of ConvexCombination.forward(*args) with parameter `comb`."""
    n = int(comb.shape[0])
    assert len(args) == n, "number of inputs must equal n"
    orig_shape = args[0].shape
    dtype = args[0].dtype
    for a in args:
        assert a.shape == orig_shape and a.dtype == dtype, \
            "all inputs must share shape and dtype"

    total = 1
    for s in orig_shape:
        total *= int(s)

    comb_f32 = comb.astype(jnp.float32)
    elt_bytes = jnp.dtype(dtype).itemsize

    # Small-problem bailout: pallas_call launch / per-step overhead dominates.
    if not force_pallas and (n + 1) * total * elt_bytes < (2 << 20):
        return _jnp_combination(args, comb_f32, dtype)

    lane = _pick_lane(total)
    M = total // lane
    body = M * lane
    tail = total - body

    if M == 0:  # smaller than one lane row -> nothing for the kernel to do
        return _jnp_combination(args, comb_f32, dtype)

    sublane = _sublane(dtype)
    tile_budget, limit_cap = _vmem_budgets()
    tile_m = _pick_tm(M, n, lane, elt_bytes, tm_hint, sublane, tile_budget)
    grid_m = pl.cdiv(M, tile_m)

    flats = [a.reshape(-1) for a in args]
    if tail:
        slabs = [f[:body].reshape(M, lane) for f in flats]
    else:
        slabs = [f.reshape(M, lane) for f in flats]  # pure reshape, no copy

    vmem_need = 2 * (n + 1) * tile_m * lane * elt_bytes
    vmem_limit = min(max(vmem_need * 5 // 4 + (2 << 20), 16 << 20), limit_cap)

    cost = pl.CostEstimate(
        flops=2 * n * body,
        transcendentals=0,
        bytes_accessed=(n + 1) * body * elt_bytes,
    )

    out2d = pl.pallas_call(
        _make_kernel(n),
        out_shape=jax.ShapeDtypeStruct((M, lane), dtype),
        grid=(grid_m,),
        in_specs=[pl.BlockSpec(memory_space=pltpu.MemorySpace.SMEM)]          # comb (n,)
                 + [pl.BlockSpec((tile_m, lane), lambda i: (i, 0))            # each input
                    for _ in range(n)],
        out_specs=pl.BlockSpec((tile_m, lane), lambda i: (i, 0)),
        compiler_params=pltpu.CompilerParams(
            dimension_semantics=("parallel",),
            vmem_limit_bytes=vmem_limit),
        cost_estimate=cost,
    )(comb_f32, *slabs)

    out_body = out2d.reshape(-1)
    if tail:
        tail_acc = flats[0][body:].astype(jnp.float32) * comb_f32[0]
        for i in range(1, n):
            tail_acc = tail_acc + flats[i][body:].astype(jnp.float32) * comb_f32[i]
        out_flat = jnp.concatenate([out_body, tail_acc.astype(dtype)])
        return out_flat.reshape(orig_shape)
    return out_body.reshape(orig_shape)


if __name__ == "__main__":
    key = jax.random.PRNGKey(0)
    n = 3
    # Deterministic parameter init, matching nn.Parameter(torch.ones(n) / n).
    comb = jnp.ones((n,), dtype=jnp.float32) / n

    def reference(xs):
        return sum(xs[i] * comb[i] for i in range(n))

    # 1) Primary (lane-divisible) shape — exercise the Pallas kernel path.
    shape = (2, 4, 16, 16)   # NCHW-style inputs, 2048 elems -> (1, 2048) slab
    keys = jax.random.split(key, n)
    inputs = [jax.random.normal(k, shape, dtype=jnp.float32) for k in keys]
    out = jax.block_until_ready(convex_combination(inputs, comb, force_pallas=True))
    assert out.shape == shape and out.dtype == jnp.float32
    assert jnp.allclose(out, reference(inputs), atol=1e-6, rtol=1e-6)

    # 1b) Same shape through the default small-problem bailout path.
    out_small = jax.block_until_ready(convex_combination(inputs, comb))
    assert jnp.allclose(out_small, reference(inputs), atol=1e-6, rtol=1e-6)

    # 2) Shape with a partial final row-block (grid=2, masked last tile).
    shape2 = (2, 4, 33, 16)  # 4224 elems -> (33, 128) slab, tile_m=24
    keys2 = jax.random.split(jax.random.PRNGKey(1), n)
    inputs2 = [jax.random.normal(k, shape2, dtype=jnp.float32) for k in keys2]
    out2 = jax.block_until_ready(convex_combination(inputs2, comb, force_pallas=True))
    assert jnp.allclose(out2, reference(inputs2), atol=1e-6, rtol=1e-6)

    # 3) Ragged size (not a multiple of 128): body via kernel, tail via jnp.
    shape3 = (3, 10, 10)     # 300 elems -> body (2, 128) + 44-elem tail
    keys3 = jax.random.split(jax.random.PRNGKey(2), n)
    inputs3 = [jax.random.normal(k, shape3, dtype=jnp.float32) for k in keys3]
    out3 = jax.block_until_ready(convex_combination(inputs3, comb, force_pallas=True))
    assert jnp.allclose(out3, reference(inputs3), atol=1e-6, rtol=1e-6)

    print("KERNEL_OK")
</pallas_src>

<mosaic_0001>
module attributes {stable_mosaic.version = 11 : i64} {
  func.func @kernel(%arg0: i32, %arg1: memref<3xf32, #tpu.memory_space<smem>>, %arg2: memref<1x2048xf32, #tpu.memory_space<vmem>>, %arg3: memref<1x2048xf32, #tpu.memory_space<vmem>>, %arg4: memref<1x2048xf32, #tpu.memory_space<vmem>>, %arg5: memref<1x2048xf32, #tpu.memory_space<vmem>>) attributes {dimension_semantics = [#tpu.dimension_semantics<parallel>], iteration_bounds = array<i64: 1>, scalar_prefetch = 0 : i64, scratch_operands = 0 : i64, tpu.core_type = #tpu.core_type<tc>, window_params = [{transform_indices = @transform_0, window_bounds = array<i64: 3>}, {transform_indices = @transform_1, window_bounds = array<i64: 1, 2048>}, {transform_indices = @transform_2, window_bounds = array<i64: 1, 2048>}, {transform_indices = @transform_3, window_bounds = array<i64: 1, 2048>}, {transform_indices = @transform_4, window_bounds = array<i64: 1, 2048>}]} {
    %c0 = arith.constant 0 : index
    %c0_0 = arith.constant 0 : index
    %0 = vector.load %arg2[%c0, %c0_0] : memref<1x2048xf32, #tpu.memory_space<vmem>>, vector<1x2048xf32>
    %c0_1 = arith.constant 0 : index
    %1 = memref.load %arg1[%c0_1] : memref<3xf32, #tpu.memory_space<smem>>
    %2 = vector.broadcast %1 : f32 to vector<1x2048xf32>
    %3 = arith.mulf %0, %2 : vector<1x2048xf32>
    %c0_2 = arith.constant 0 : index
    %c0_3 = arith.constant 0 : index
    %4 = vector.load %arg3[%c0_2, %c0_3] : memref<1x2048xf32, #tpu.memory_space<vmem>>, vector<1x2048xf32>
    %c1 = arith.constant 1 : index
    %5 = memref.load %arg1[%c1] : memref<3xf32, #tpu.memory_space<smem>>
    %6 = vector.broadcast %5 : f32 to vector<1x2048xf32>
    %7 = arith.mulf %4, %6 : vector<1x2048xf32>
    %8 = arith.addf %3, %7 : vector<1x2048xf32>
    %c0_4 = arith.constant 0 : index
    %c0_5 = arith.constant 0 : index
    %9 = vector.load %arg4[%c0_4, %c0_5] : memref<1x2048xf32, #tpu.memory_space<vmem>>, vector<1x2048xf32>
    %c2 = arith.constant 2 : index
    %10 = memref.load %arg1[%c2] : memref<3xf32, #tpu.memory_space<smem>>
    %11 = vector.broadcast %10 : f32 to vector<1x2048xf32>
    %12 = arith.mulf %9, %11 : vector<1x2048xf32>
    %13 = arith.addf %8, %12 : vector<1x2048xf32>
    %c0_6 = arith.constant 0 : index
    %c0_7 = arith.constant 0 : index
    %14 = vector.load %arg5[%c0_6, %c0_7] : memref<1x2048xf32, #tpu.memory_space<vmem>>, vector<1x2048xf32>
    tpu.vector_store %arg5[%c0_6, %c0_7], %13 {strides = array<i32>} : memref<1x2048xf32, #tpu.memory_space<vmem>>, vector<1x2048xf32>,
    return
  }
  func.func @transform_0(%arg0: i32) -> i32 {
    %c0_i32 = arith.constant 0 : i32
    %c0_i32_0 = arith.constant 0 : i32
    return %c0_i32 : i32
  }
  func.func @transform_1(%arg0: i32) -> (i32, i32) {
    %c0_i32 = arith.constant 0 : i32
    %c0_i32_0 = arith.constant 0 : i32
    return %arg0, %c0_i32 : i32, i32
  }
  func.func @transform_2(%arg0: i32) -> (i32, i32) {
    %c0_i32 = arith.constant 0 : i32
    %c0_i32_0 = arith.constant 0 : i32
    return %arg0, %c0_i32 : i32, i32
  }
  func.func @transform_3(%arg0: i32) -> (i32, i32) {
    %c0_i32 = arith.constant 0 : i32
    %c0_i32_0 = arith.constant 0 : i32
    return %arg0, %c0_i32 : i32, i32
  }
  func.func @transform_4(%arg0: i32) -> (i32, i32) {
    %c0_i32 = arith.constant 0 : i32
    %c0_i32_0 = arith.constant 0 : i32
    return %arg0, %c0_i32 : i32, i32
  }
}

</mosaic_0001>

<llo_original>
// kernel: tpu_custom_call.1
$region0: #{tpu_custom_call.1}
  #allocation0 [shape = 'u32[]', space=smem, size = 0x4, offset = 0x4, fixed_abs, tag = 'smem constant byte address 0x4 - core index']
  #allocation1 [shape = 'u32[144,128]{1,0:T(1,128)}', space=vmem, size = 0x12000, scoped, tag = 'internal scratch']
  %s0 = inlined_call_operand.hbm [shape: f32[3], index: 0, kind: input, shape index: {}]
  %s1 = inlined_call_operand.hbm [shape: f32[1,2048], index: 1, kind: input, shape index: {}]
  %s2 = inlined_call_operand.hbm [shape: f32[1,2048], index: 2, kind: input, shape index: {}]
  %s3 = inlined_call_operand.hbm [shape: f32[1,2048], index: 3, kind: input, shape index: {}]
  %s4 = inlined_call_operand.hbm [shape: f32[1,2048], index: 4, kind: output, shape index: {}]
  %s5 = sld [smem:[#allocation0]]
  $region42: #{tpu_custom_call.1} parent=0
    _
  %s7 = ssub.s32 1, %s5
  %s8 = scalar_select 0, %s7, %s5
  $region1: #{tpu_custom_call.1} parent=0
    #allocation2 [shape = 'u8[512]{0}', space=smem, size = 0x200, scoped, tag = 'input window, operand 0, single buffered']
    #allocation3 [shape = 's32[1]{0}', space=sflag, size = 0x4, scoped, tag = 'scoped memory for tpu_custom_call.1']
    #allocation4 [shape = 's32[1]{0}', space=sflag, size = 0x4, scoped, tag = 'scoped memory for tpu_custom_call.1']
    #allocation5 [shape = 's32[1]{0}', space=sflag, size = 0x4, scoped, tag = 'scoped memory for tpu_custom_call.1']
    #allocation6 [shape = 'u8[8192]{0}', space=vmem, size = 0x2000, scoped, tag = 'input window, operand 1, single buffered']
    #allocation7 [shape = 'u8[8192]{0}', space=vmem, size = 0x2000, scoped, tag = 'input window, operand 2, single buffered']
    #allocation8 [shape = 's32[1]{0}', space=sflag, size = 0x4, scoped, tag = 'scoped memory for tpu_custom_call.1']
    #allocation9 [shape = 'u8[8192]{0}', space=vmem, size = 0x2000, scoped, tag = 'input window, operand 3, single buffered']
    #allocation10 [shape = 'u8[8192]{0}', space=vmem, size = 0x2000, scoped, tag = 'output window, operand 0, single buffered']
    %9 = vsyncpa [#allocation5], 0
    %10 = vsyncpa [#allocation3], 0
    %11 = vsyncpa [#allocation8], 0
    %12 = vsyncpa [#allocation4], 0
    // Predicated region
    $region2: #{tpu_custom_call.1} parent=1 // pred_check
      _
    $region3: #{tpu_custom_call.1} parent=1 // pred_check_branch
      %14 = sbr.rel (0) target = $region5
    $region4: #{tpu_custom_call.1} parent=1 // pred_region
      %s16 = ssub.s32 16, 16
      %17 = vsyncadd [#allocation5], %s16
      %20 = dma.hbm_to_smem %s0, 16, [#allocation2], [#allocation5]
    $region5: #{tpu_custom_call.1} parent=1 // pred_fallthru
      _
    // Predicated region
    $region6: #{tpu_custom_call.1} parent=1 // pred_check
      _
    $region7: #{tpu_custom_call.1} parent=1 // pred_check_branch
      %22 = sbr.rel (0) target = $region9
    $region8: #{tpu_custom_call.1} parent=1 // pred_region
      %s24 = ssub.s32 256, 256
      %25 = vsyncadd [#allocation3], %s24
      %s27 = sshll.u32 [#allocation6], 4
      %s28 = int_to_ptr.vmem [resolvable:$true] %s27
      %30 = dma.hbm_to_vmem [thread:$0]  %s1, 256, %s28, [#allocation3]
    $region9: #{tpu_custom_call.1} parent=1 // pred_fallthru
      _
    // Predicated region
    $region10: #{tpu_custom_call.1} parent=1 // pred_check
      _
    $region11: #{tpu_custom_call.1} parent=1 // pred_check_branch
      %32 = sbr.rel (0) target = $region13
    $region12: #{tpu_custom_call.1} parent=1 // pred_region
      %s34 = ssub.s32 256, 256
      %35 = vsyncadd [#allocation8], %s34
      %s37 = sshll.u32 [#allocation7], 4
      %s38 = int_to_ptr.vmem [resolvable:$true] %s37
      %40 = dma.hbm_to_vmem [thread:$0]  %s2, 256, %s38, [#allocation8]
    $region13: #{tpu_custom_call.1} parent=1 // pred_fallthru
      _
    // Predicated region
    $region14: #{tpu_custom_call.1} parent=1 // pred_check
      _
    $region15: #{tpu_custom_call.1} parent=1 // pred_check_branch
      %42 = sbr.rel (0) target = $region17
    $region16: #{tpu_custom_call.1} parent=1 // pred_region
      %s44 = ssub.s32 256, 256
      %45 = vsyncadd [#allocation8], %s44
      %s47 = sshll.u32 [#allocation9], 4
      %s48 = int_to_ptr.vmem [resolvable:$true] %s47
      %50 = dma.hbm_to_vmem [thread:$0]  %s3, 256, %s48, [#allocation8]
    $region17: #{tpu_custom_call.1} parent=1 // pred_fallthru
      _
    // Predicated region
    $region18: #{tpu_custom_call.1} parent=1 // pred_check
      _
    $region19: #{tpu_custom_call.1} parent=1 // pred_check_branch
      %52 = sbr.rel (0) target = $region21
    $region20: #{tpu_custom_call.1} parent=1 // pred_region
      %53 = dma.done [#allocation5], 16
    $region21: #{tpu_custom_call.1} parent=1 // pred_fallthru
      _
    // Predicated region
    $region22: #{tpu_custom_call.1} parent=1 // pred_check
      _
    $region23: #{tpu_custom_call.1} parent=1 // pred_check_branch
      %55 = sbr.rel (0) target = $region25
    $region24: #{tpu_custom_call.1} parent=1 // pred_region
      %56 = dma.done [#allocation3], 256
    $region25: #{tpu_custom_call.1} parent=1 // pred_fallthru
      _
    // Predicated region
    $region26: #{tpu_custom_call.1} parent=1 // pred_check
      _
    $region27: #{tpu_custom_call.1} parent=1 // pred_check_branch
      %58 = sbr.rel (0) target = $region29
    $region28: #{tpu_custom_call.1} parent=1 // pred_region
      %59 = dma.done [#allocation8], 256
    $region29: #{tpu_custom_call.1} parent=1 // pred_fallthru
      _
    // Predicated region
    $region30: #{tpu_custom_call.1} parent=1 // pred_check
      _
    $region31: #{tpu_custom_call.1} parent=1 // pred_check_branch
      %61 = sbr.rel (0) target = $region33
    $region32: #{tpu_custom_call.1} parent=1 // pred_region
      %62 = dma.done [#allocation8], 256
    $region33: #{tpu_custom_call.1} parent=1 // pred_fallthru
      _
    %63 = sfence
    %v64 = vld [vmem:[#allocation6] sm:$0xff]
    %v65 = vld [vmem:[#allocation6 + $0x8] sm:$0xff]
    %s66 = sld [smem:[#allocation2]]
    %v67 = vstv %s66
    %v68 = vmul.f32 %v64, %v67
    %v69 = vmul.f32 %v65, %v67
    %v70 = vld [vmem:[#allocation7] sm:$0xff]
    %v71 = vld [vmem:[#allocation7 + $0x8] sm:$0xff]
    %s72 = sld [smem:[#allocation2 + $0x1]]
    %v73 = vstv %s72
    %v74 = vmul.f32 %v70, %v73
    %v75 = vmul.f32 %v71, %v73
    %v76 = vadd.f32 %v68, %v74
    %v77 = vadd.f32 %v69, %v75
    %v78 = vld [vmem:[#allocation9] sm:$0xff]
    %v79 = vld [vmem:[#allocation9 + $0x8] sm:$0xff]
    %s80 = sld [smem:[#allocation2 + $0x2]]
    %v81 = vstv %s80
    %v82 = vmul.f32 %v78, %v81
    %v83 = vmul.f32 %v79, %v81
    %v84 = vadd.f32 %v76, %v82
    %v85 = vadd.f32 %v77, %v83
    %86 = vst [vmem:[#allocation10] sm:$0xff] %v84
    %87 = vst [vmem:[#allocation10 + $0x8] sm:$0xff] %v85
    // Predicated region
    $region34: #{tpu_custom_call.1} parent=1 // pred_check
      _
    $region35: #{tpu_custom_call.1} parent=1 // pred_check_branch
      %89 = sbr.rel (0) target = $region37
    $region36: #{tpu_custom_call.1} parent=1 // pred_region
      %s91 = ssub.s32 256, 256
      %92 = vsyncadd [#allocation4], %s91
      %s94 = sshll.u32 [#allocation10], 4
      %s95 = int_to_ptr.vmem [resolvable:$true] %s94
      %97 = dma.vmem_to_hbm [thread:$0]  %s95, 256, %s4, [#allocation4]
    $region37: #{tpu_custom_call.1} parent=1 // pred_fallthru
      _
    // Predicated region
    $region38: #{tpu_custom_call.1} parent=1 // pred_check
      _
    $region39: #{tpu_custom_call.1} parent=1 // pred_check_branch
      %99 = sbr.rel (0) target = $region41
    $region40: #{tpu_custom_call.1} parent=1 // pred_region
      %100 = dma.done [#allocation4], 256
    $region41: #{tpu_custom_call.1} parent=1 // pred_fallthru
      _
    %101 = vsyncpa [#allocation3], 1
    %102 = vsyncpa [#allocation8], 1
    %103 = vsyncpa [#allocation4], 1
    %104 = vsyncpa [#allocation5], 1

</llo_original>
